<compile_context>
chip_gen: v7x
topology: tpu7x:2x2x1
jax: 0.10.0
libtpu: 0.0.40
codegen_flags: <defaults>
</compile_context>

<pallas_src>
import jax
import jax.numpy as jnp
from jax.experimental import pallas as pl
from jax.experimental.pallas import tpu as pltpu

_LANE = 128


def _round_up(x, m):
    return ((x + m - 1) // m) * m


def _elu(x):
    # ELU(alpha=1). Clamp the exp argument so the discarded (x > 0) branch never
    # overflows to inf (safe under autodiff, same forward value as expm1 form).
    return jnp.where(x > 0, x, jnp.exp(jnp.minimum(x, 0.0)) - 1.0)


def mlp_softmax_kernel(obs_ref,
                       w0_ref, b0_ref,
                       w1_ref, b1_ref,
                       w2_ref, b2_ref,
                       out_ref):
    """One batch tile: 3-layer MLP (bf16 MXU, f32 accum) + f32 softmax."""
    # Layer 0: Linear(input_dim -> hidden0) + ELU
    x = obs_ref[...].astype(jnp.bfloat16)
    h = jnp.dot(x, w0_ref[...], preferred_element_type=jnp.float32) + b0_ref[...]
    h = _elu(h)

    # Layer 1: Linear(hidden0 -> hidden1) + ELU
    h = jnp.dot(h.astype(jnp.bfloat16), w1_ref[...],
                preferred_element_type=jnp.float32) + b1_ref[...]
    h = _elu(h)

    # Layer 2 (output): Linear(hidden1 -> num_skills_padded).
    # Padded lanes have zero weights and a -1e30 bias => exp underflows to 0,
    # so the softmax over the padded width equals the softmax over num_skills.
    logits = jnp.dot(h.astype(jnp.bfloat16), w2_ref[...],
                     preferred_element_type=jnp.float32) + b2_ref[...]

    m = jnp.max(logits, axis=-1, keepdims=True)
    e = jnp.exp(logits - m)
    denom = jnp.sum(e, axis=-1, keepdims=True)
    out_ref[...] = (e * pl.reciprocal(denom, approx=True)).astype(out_ref.dtype)


def prepare_params(params, num_skills):
    """One-time param prep: bf16 weights, (1, out) f32 biases, lane-padded head."""
    (w0, b0), (w1, b1), (w2, b2) = params
    out_pad = _round_up(max(num_skills, _LANE), _LANE)

    w2p = jnp.zeros((w2.shape[0], out_pad), jnp.float32).at[:, :num_skills].set(w2)
    b2p = jnp.full((1, out_pad), -1e30, jnp.float32).at[:, :num_skills].set(
        jnp.reshape(b2, (1, num_skills)))

    return (
        w0.astype(jnp.bfloat16), jnp.reshape(b0, (1, -1)).astype(jnp.float32),
        w1.astype(jnp.bfloat16), jnp.reshape(b1, (1, -1)).astype(jnp.float32),
        w2p.astype(jnp.bfloat16), b2p,
    )


def weights_forward(obs, prepared, num_skills, *, block_rows=512):
    """softmax(MLP(obs)); obs is [batch, input_dim] f32."""
    w0, b0, w1, b1, w2p, b2p = prepared
    batch, input_dim = obs.shape
    out_pad = w2p.shape[1]

    # Batch tile: full batch if it fits in one tile (block == full dim is always
    # legal), else a fixed multiple-of-8 tile so the grid pipelines DMA/compute.
    tb = batch if batch <= block_rows else block_rows
    grid = (pl.cdiv(batch, tb),)

    row_map = lambda i: (i, 0)       # tiles walk the batch dim
    const_map = lambda i: (0, 0)     # weights/biases stay resident
    resident = lambda a: pl.BlockSpec(a.shape, const_map)

    out_padded = pl.pallas_call(
        mlp_softmax_kernel,
        out_shape=jax.ShapeDtypeStruct((batch, out_pad), jnp.float32),
        grid=grid,
        in_specs=[
            pl.BlockSpec((tb, input_dim), row_map),
            resident(w0), resident(b0),
            resident(w1), resident(b1),
            resident(w2p), resident(b2p),
        ],
        out_specs=pl.BlockSpec((tb, out_pad), row_map),
        compiler_params=pltpu.CompilerParams(
            dimension_semantics=("parallel",),
            vmem_limit_bytes=32 * 1024 * 1024,
        ),
    )(obs, w0, b0, w1, b1, w2p, b2p)

    return out_padded[:, :num_skills]


def init_params(key, input_dim, hidden_dims, num_skills):
    """weights_init equivalent: xavier_uniform weights, bias = 0.5.

    Weights are stored [in_features, out_features] (transpose of PyTorch) so the
    kernel computes x @ W + b directly on the MXU.
    """
    dims = [input_dim] + list(hidden_dims) + [num_skills]
    params = []
    for i in range(len(dims) - 1):
        key, sub = jax.random.split(key)
        fan_in, fan_out = dims[i], dims[i + 1]
        limit = jnp.sqrt(6.0 / (fan_in + fan_out))
        w = jax.random.uniform(sub, (fan_in, fan_out), jnp.float32, -limit, limit)
        b = jnp.full((1, fan_out), 0.5, jnp.float32)
        params.append((w, b))
    return params


def _reference_forward(obs, params):
    """Pure-JAX f32 reference of the PyTorch module."""
    x = obs
    for i, (w, b) in enumerate(params):
        x = x @ w + b
        if i < len(params) - 1:
            x = jnp.where(x > 0, x, jnp.exp(jnp.minimum(x, 0.0)) - 1.0)  # ELU
    return jax.nn.softmax(x, axis=-1)


if __name__ == "__main__":
    key = jax.random.PRNGKey(0)

    # Small shapes consistent with the module.
    batch = 8
    input_dim = 32
    hidden_dims = [64, 32]
    num_skills = 8

    k_obs, k_params = jax.random.split(key)
    obs = jax.random.normal(k_obs, (batch, input_dim), jnp.float32)
    params = init_params(k_params, input_dim, hidden_dims, num_skills)
    prepared = prepare_params(params, num_skills)

    out = weights_forward(obs, prepared, num_skills)
    out = jax.block_until_ready(out)

    ref = _reference_forward(obs, params)

    assert out.shape == (batch, num_skills)
    # Rows of a softmax sum to 1 (loose tol: approx reciprocal + bf16 matmuls).
    assert jnp.allclose(jnp.sum(out, axis=-1), 1.0, atol=5e-3)
    # Matches the f32 reference up to bf16 matmul error.
    assert float(jnp.max(jnp.abs(out - ref))) < 5e-2

    print("KERNEL_OK")
</pallas_src>

<mosaic_0001>
module attributes {stable_mosaic.version = 11 : i64} {
  func.func @mlp_softmax_kernel(%arg0: i32, %arg1: memref<8x32xf32, #tpu.memory_space<vmem>>, %arg2: memref<32x64xbf16, #tpu.memory_space<vmem>>, %arg3: memref<1x64xf32, #tpu.memory_space<vmem>>, %arg4: memref<64x32xbf16, #tpu.memory_space<vmem>>, %arg5: memref<1x32xf32, #tpu.memory_space<vmem>>, %arg6: memref<32x128xbf16, #tpu.memory_space<vmem>>, %arg7: memref<1x128xf32, #tpu.memory_space<vmem>>, %arg8: memref<8x128xf32, #tpu.memory_space<vmem>>) attributes {dimension_semantics = [#tpu.dimension_semantics<parallel>], iteration_bounds = array<i64: 1>, scalar_prefetch = 0 : i64, scratch_operands = 0 : i64, tpu.core_type = #tpu.core_type<tc>, window_params = [{transform_indices = @transform_0, window_bounds = array<i64: 8, 32>}, {pipeline_mode = #tpu.pipeline_mode<synchronous>, transform_indices = @transform_1, window_bounds = array<i64: 32, 64>}, {pipeline_mode = #tpu.pipeline_mode<synchronous>, transform_indices = @transform_2, window_bounds = array<i64: 1, 64>}, {pipeline_mode = #tpu.pipeline_mode<synchronous>, transform_indices = @transform_3, window_bounds = array<i64: 64, 32>}, {pipeline_mode = #tpu.pipeline_mode<synchronous>, transform_indices = @transform_4, window_bounds = array<i64: 1, 32>}, {pipeline_mode = #tpu.pipeline_mode<synchronous>, transform_indices = @transform_5, window_bounds = array<i64: 32, 128>}, {pipeline_mode = #tpu.pipeline_mode<synchronous>, transform_indices = @transform_6, window_bounds = array<i64: 1, 128>}, {transform_indices = @transform_7, window_bounds = array<i64: 8, 128>}]} {
    %c0 = arith.constant 0 : index
    %c0_0 = arith.constant 0 : index
    %0 = vector.load %arg1[%c0, %c0_0] : memref<8x32xf32, #tpu.memory_space<vmem>>, vector<8x32xf32>
    %1 = arith.truncf %0 : vector<8x32xf32> to vector<8x32xbf16>
    %c0_1 = arith.constant 0 : index
    %c0_2 = arith.constant 0 : index
    %2 = vector.load %arg2[%c0_1, %c0_2] : memref<32x64xbf16, #tpu.memory_space<vmem>>, vector<32x64xbf16>
    %cst = arith.constant dense<0.000000e+00> : vector<8x64xf32>
    %3 = tpu.matmul %1, %2, %cst {dimension_numbers = #tpu.dot_dimension_numbers<[1], [0], [0], [1], [0, 0, 1, 1], [], []>} : vector<8x32xbf16>, vector<32x64xbf16>, vector<8x64xf32> -> vector<8x64xf32>
    %c0_3 = arith.constant 0 : index
    %c0_4 = arith.constant 0 : index
    %4 = vector.load %arg3[%c0_3, %c0_4] : memref<1x64xf32, #tpu.memory_space<vmem>>, vector<1x64xf32>
    %5 = vector.broadcast %4 : vector<1x64xf32> to vector<8x64xf32>
    %6 = arith.addf %3, %5 : vector<8x64xf32>
    %cst_5 = arith.constant 0.000000e+00 : f32
    %7 = vector.broadcast %cst_5 : f32 to vector<8x64xf32>
    %8 = arith.cmpf ogt, %6, %7 : vector<8x64xf32>
    %cst_6 = arith.constant 0.000000e+00 : f32
    %9 = vector.broadcast %cst_6 : f32 to vector<8x64xf32>
    %10 = arith.minimumf %6, %9 : vector<8x64xf32>
    %11 = math.exp %10 : vector<8x64xf32>
    %cst_7 = arith.constant 1.000000e+00 : f32
    %12 = vector.broadcast %cst_7 : f32 to vector<8x64xf32>
    %13 = arith.subf %11, %12 : vector<8x64xf32>
    %14 = arith.select %8, %6, %13 : vector<8x64xi1>, vector<8x64xf32>
    %15 = arith.truncf %14 : vector<8x64xf32> to vector<8x64xbf16>
    %c0_8 = arith.constant 0 : index
    %c0_9 = arith.constant 0 : index
    %16 = vector.load %arg4[%c0_8, %c0_9] : memref<64x32xbf16, #tpu.memory_space<vmem>>, vector<64x32xbf16>
    %cst_10 = arith.constant dense<0.000000e+00> : vector<8x32xf32>
    %17 = tpu.matmul %15, %16, %cst_10 {dimension_numbers = #tpu.dot_dimension_numbers<[1], [0], [0], [1], [0, 0, 1, 1], [], []>} : vector<8x64xbf16>, vector<64x32xbf16>, vector<8x32xf32> -> vector<8x32xf32>
    %c0_11 = arith.constant 0 : index
    %c0_12 = arith.constant 0 : index
    %18 = vector.load %arg5[%c0_11, %c0_12] : memref<1x32xf32, #tpu.memory_space<vmem>>, vector<1x32xf32>
    %19 = vector.broadcast %18 : vector<1x32xf32> to vector<8x32xf32>
    %20 = arith.addf %17, %19 : vector<8x32xf32>
    %cst_13 = arith.constant 0.000000e+00 : f32
    %21 = vector.broadcast %cst_13 : f32 to vector<8x32xf32>
    %22 = arith.cmpf ogt, %20, %21 : vector<8x32xf32>
    %cst_14 = arith.constant 0.000000e+00 : f32
    %23 = vector.broadcast %cst_14 : f32 to vector<8x32xf32>
    %24 = arith.minimumf %20, %23 : vector<8x32xf32>
    %25 = math.exp %24 : vector<8x32xf32>
    %cst_15 = arith.constant 1.000000e+00 : f32
    %26 = vector.broadcast %cst_15 : f32 to vector<8x32xf32>
    %27 = arith.subf %25, %26 : vector<8x32xf32>
    %28 = arith.select %22, %20, %27 : vector<8x32xi1>, vector<8x32xf32>
    %29 = arith.truncf %28 : vector<8x32xf32> to vector<8x32xbf16>
    %c0_16 = arith.constant 0 : index
    %c0_17 = arith.constant 0 : index
    %30 = vector.load %arg6[%c0_16, %c0_17] : memref<32x128xbf16, #tpu.memory_space<vmem>>, vector<32x128xbf16>
    %cst_18 = arith.constant dense<0.000000e+00> : vector<8x128xf32>
    %31 = tpu.matmul %29, %30, %cst_18 {dimension_numbers = #tpu.dot_dimension_numbers<[1], [0], [0], [1], [0, 0, 1, 1], [], []>} : vector<8x32xbf16>, vector<32x128xbf16>, vector<8x128xf32> -> vector<8x128xf32>
    %c0_19 = arith.constant 0 : index
    %c0_20 = arith.constant 0 : index
    %32 = vector.load %arg7[%c0_19, %c0_20] : memref<1x128xf32, #tpu.memory_space<vmem>>, vector<1x128xf32>
    %33 = vector.broadcast %32 : vector<1x128xf32> to vector<8x128xf32>
    %34 = arith.addf %31, %33 : vector<8x128xf32>
    %cst_21 = arith.constant dense<0xFF800000> : vector<8xf32>
    %35 = vector.multi_reduction <maximumf>, %34, %cst_21 [1] : vector<8x128xf32> to vector<8xf32>
    %36 = vector.shape_cast %35 : vector<8xf32> to vector<8x1xf32>
    %37 = vector.broadcast %36 : vector<8x1xf32> to vector<8x128xf32>
    %38 = arith.subf %34, %37 : vector<8x128xf32>
    %39 = math.exp %38 : vector<8x128xf32>
    %cst_22 = arith.constant dense<0.000000e+00> : vector<8xf32>
    %40 = vector.multi_reduction <add>, %39, %cst_22 [1] : vector<8x128xf32> to vector<8xf32>
    %41 = vector.shape_cast %40 : vector<8xf32> to vector<8x1xf32>
    %42 = tpu.reciprocal %41 {approx = true} : vector<8x1xf32> -> vector<8x1xf32>
    %43 = vector.broadcast %42 : vector<8x1xf32> to vector<8x128xf32>
    %44 = arith.mulf %39, %43 : vector<8x128xf32>
    %c0_23 = arith.constant 0 : index
    %c0_24 = arith.constant 0 : index
    %45 = vector.load %arg8[%c0_23, %c0_24] : memref<8x128xf32, #tpu.memory_space<vmem>>, vector<8x128xf32>
    tpu.vector_store %arg8[%c0_23, %c0_24], %44 {strides = array<i32>} : memref<8x128xf32, #tpu.memory_space<vmem>>, vector<8x128xf32>,
    return
  }
  func.func @transform_0(%arg0: i32) -> (i32, i32) {
    %c0_i32 = arith.constant 0 : i32
    %c0_i32_0 = arith.constant 0 : i32
    return %arg0, %c0_i32 : i32, i32
  }
  func.func @transform_1(%arg0: i32) -> (i32, i32) {
    %c0_i32 = arith.constant 0 : i32
    %c0_i32_0 = arith.constant 0 : i32
    %c0_i32_1 = arith.constant 0 : i32
    return %c0_i32, %c0_i32_0 : i32, i32
  }
  func.func @transform_2(%arg0: i32) -> (i32, i32) {
    %c0_i32 = arith.constant 0 : i32
    %c0_i32_0 = arith.constant 0 : i32
    %c0_i32_1 = arith.constant 0 : i32
    return %c0_i32, %c0_i32_0 : i32, i32
  }
  func.func @transform_3(%arg0: i32) -> (i32, i32) {
    %c0_i32 = arith.constant 0 : i32
    %c0_i32_0 = arith.constant 0 : i32
    %c0_i32_1 = arith.constant 0 : i32
    return %c0_i32, %c0_i32_0 : i32, i32
  }
  func.func @transform_4(%arg0: i32) -> (i32, i32) {
    %c0_i32 = arith.constant 0 : i32
    %c0_i32_0 = arith.constant 0 : i32
    %c0_i32_1 = arith.constant 0 : i32
    return %c0_i32, %c0_i32_0 : i32, i32
  }
  func.func @transform_5(%arg0: i32) -> (i32, i32) {
    %c0_i32 = arith.constant 0 : i32
    %c0_i32_0 = arith.constant 0 : i32
    %c0_i32_1 = arith.constant 0 : i32
    return %c0_i32, %c0_i32_0 : i32, i32
  }
  func.func @transform_6(%arg0: i32) -> (i32, i32) {
    %c0_i32 = arith.constant 0 : i32
    %c0_i32_0 = arith.constant 0 : i32
    %c0_i32_1 = arith.constant 0 : i32
    return %c0_i32, %c0_i32_0 : i32, i32
  }
  func.func @transform_7(%arg0: i32) -> (i32, i32) {
    %c0_i32 = arith.constant 0 : i32
    %c0_i32_0 = arith.constant 0 : i32
    return %arg0, %c0_i32 : i32, i32
  }
}

</mosaic_0001>

<llo_original>
// kernel: tpu_custom_call.1
$region0: #{tpu_custom_call.1}
  #allocation0 [shape = 'u32[]', space=smem, size = 0x4, offset = 0x4, fixed_abs, tag = 'smem constant byte address 0x4 - core index']
  #allocation1 [shape = 'u32[144,128]{1,0:T(1,128)}', space=vmem, size = 0x12000, scoped, tag = 'internal scratch']
  %s0 = inlined_call_operand.vmem [shape: f32[8,32], index: 0, kind: input, shape index: {}]
  %s1 = inlined_call_operand.vmem [shape: bf16[32,64], index: 1, kind: input, shape index: {}]
  %s2 = inlined_call_operand.vmem [shape: f32[1,64], index: 2, kind: input, shape index: {}]
  %s3 = inlined_call_operand.vmem [shape: bf16[64,32], index: 3, kind: input, shape index: {}]
  %s4 = inlined_call_operand.vmem [shape: f32[1,32], index: 4, kind: input, shape index: {}]
  %s5 = inlined_call_operand.vmem [shape: bf16[32,128], index: 5, kind: input, shape index: {}]
  %s6 = inlined_call_operand.vmem [shape: f32[1,128], index: 6, kind: input, shape index: {}]
  %s7 = inlined_call_operand.hbm [shape: f32[8,128], index: 7, kind: output, shape index: {}]
  %s8 = sld [smem:[#allocation0]]
  $region38: #{tpu_custom_call.1} parent=0
    _
  %s10 = ssub.s32 1, %s8
  %s11 = scalar_select 0, %s10, %s8
  $region1: #{tpu_custom_call.1} parent=0
    #allocation2 [shape = 'u8[4096]{0}', space=vmem, size = 0x1000, scoped, tag = 'output window, operand 0, single buffered']
    #allocation3 [shape = 's32[1]{0}', space=sflag, size = 0x4, scoped, tag = 'scoped memory for tpu_custom_call.1']
    %12 = vsyncpa [#allocation3], 0
    // Predicated region
    $region2: #{tpu_custom_call.1} parent=1 // pred_check
      _
    $region3: #{tpu_custom_call.1} parent=1 // pred_check_branch
      %14 = sbr.rel (0) target = $region5
    $region4: #{tpu_custom_call.1} parent=1 // pred_region
      _
    $region5: #{tpu_custom_call.1} parent=1 // pred_fallthru
      _
    // Predicated region
    $region6: #{tpu_custom_call.1} parent=1 // pred_check
      _
    $region7: #{tpu_custom_call.1} parent=1 // pred_check_branch
      %16 = sbr.rel (0) target = $region9
    $region8: #{tpu_custom_call.1} parent=1 // pred_region
      _
    $region9: #{tpu_custom_call.1} parent=1 // pred_fallthru
      _
    // Predicated region
    $region10: #{tpu_custom_call.1} parent=1 // pred_check
      _
    $region11: #{tpu_custom_call.1} parent=1 // pred_check_branch
      %18 = sbr.rel (0) target = $region13
    $region12: #{tpu_custom_call.1} parent=1 // pred_region
      _
    $region13: #{tpu_custom_call.1} parent=1 // pred_fallthru
      _
    // Predicated region
    $region14: #{tpu_custom_call.1} parent=1 // pred_check
      _
    $region15: #{tpu_custom_call.1} parent=1 // pred_check_branch
      %20 = sbr.rel (0) target = $region17
    $region16: #{tpu_custom_call.1} parent=1 // pred_region
      _
    $region17: #{tpu_custom_call.1} parent=1 // pred_fallthru
      _
    // Predicated region
    $region18: #{tpu_custom_call.1} parent=1 // pred_check
      _
    $region19: #{tpu_custom_call.1} parent=1 // pred_check_branch
      %22 = sbr.rel (0) target = $region21
    $region20: #{tpu_custom_call.1} parent=1 // pred_region
      _
    $region21: #{tpu_custom_call.1} parent=1 // pred_fallthru
      _
    // Predicated region
    $region22: #{tpu_custom_call.1} parent=1 // pred_check
      _
    $region23: #{tpu_custom_call.1} parent=1 // pred_check_branch
      %24 = sbr.rel (0) target = $region25
    $region24: #{tpu_custom_call.1} parent=1 // pred_region
      _
    $region25: #{tpu_custom_call.1} parent=1 // pred_fallthru
      _
    // Predicated region
    $region26: #{tpu_custom_call.1} parent=1 // pred_check
      _
    $region27: #{tpu_custom_call.1} parent=1 // pred_check_branch
      %26 = sbr.rel (0) target = $region29
    $region28: #{tpu_custom_call.1} parent=1 // pred_region
      _
    $region29: #{tpu_custom_call.1} parent=1 // pred_fallthru
      _
    %v28 = vld [vmem:[%s0] sm:$0xff]
    %v29 = vpack.c.bf16 %v28, %v28
    %v30 = vld [vmem:[%s1] sm:$0xf]
    %v31 = vld [vmem:[%s1 + $0x4] sm:$0xf]
    %v32 = vld [vmem:[%s1 + $0x8] sm:$0xf]
    %v33 = vld [vmem:[%s1 + $0xc] sm:$0xf]
    %v34 = vld [vmem:[%s2] sm:$0x1]
    %v36 = vlaneseq
    %v37 = vshrl.u32 %v36, 7
    %v38 = vsub.s32 0, %v37
    %v39 = vrot.slane %v34, %v38
    %v45 = vunpack.c.l.b16 %v30
    %v46 = vunpack.c.l.b16 %v31
    %v47 = vunpack.c.l.b16 %v32
    %v48 = vunpack.c.l.b16 %v33
    %v49 = vpack.c.b16 %v46, %v45
    %v50 = vpack.c.b16 %v48, %v47
    %vm53 = vcmask 261120
    %v55 = vsel %vm53, %v29, 0
    %57 = vmatprep.subr.bf16.mxu0 0
    %58 = vmatpush1.bf16.msra.mxu0 %v49
    %59 = vmatprep.subr.bf16.mxu0 0
    %60 = vmatpush1.bf16.msra.mxu0 %v50
    %61 = vmatprep.subr.bf16.mxu0 0
    %62 = vmatpush1.bf16.msra.mxu0 0
    %63 = vmatprep.subr.bf16.mxu0 0
    %64 = vmatpush1.bf16.msra.mxu0 0
    %65 = vmatprep.subr.bf16.mxu0 0
    %66 = vmatpush1.bf16.msra.mxu0 0
    %67 = vmatprep.subr.bf16.mxu0 0
    %68 = vmatpush1.bf16.msra.mxu0 0
    %69 = vmatprep.subr.bf16.mxu0 0
    %70 = vmatpush1.bf16.msra.mxu0 0
    %71 = vmatprep.subr.bf16.mxu0 0
    %72 = vmatpush1.bf16.msra.mxu0 0
    %73 = vmatprep.subr.bf16.mxu0 0
    %74 = vmatpush1.bf16.msra.mxu0 0
    %75 = vmatprep.subr.bf16.mxu0 0
    %76 = vmatpush1.bf16.msra.mxu0 0
    %77 = vmatprep.subr.bf16.mxu0 0
    %78 = vmatpush1.bf16.msra.mxu0 0
    %79 = vmatprep.subr.bf16.mxu0 0
    %80 = vmatpush1.bf16.msra.mxu0 0
    %81 = vmatprep.subr.bf16.mxu0 0
    %82 = vmatpush1.bf16.msra.mxu0 0
    %83 = vmatprep.subr.bf16.mxu0 0
    %84 = vmatpush1.bf16.msra.mxu0 0
    %85 = vmatprep.subr.bf16.mxu0 0
    %86 = vmatpush1.bf16.msra.mxu0 0
    %87 = vmatprep.subr.bf16.mxu0 0
    %88 = vmatpush1.bf16.msra.mxu0 0
    %89 = vmatprep.mubr.bf16.mxu0 0
    %90 = vmatmul.mubr.bf16.gmra.mrb[0].mxu0 %v55
    %v91 = vpop.f32.mrb[0].mxu0
    %v92 = vadd.f32 %v39, %v91
    %v93 = vpop.f32.mrb[0].mxu0
    %v94 = vpop.f32.mrb[0].mxu0
    %v95 = vpop.f32.mrb[0].mxu0
    %96 = vdwg.mxu0
    %vm97 = vcmp.gt.f32.partialorder %v92, 0.0
    %v98 = vmin.f32 %v92, 0.0
    %v99 = vmul.f32 %v98, 1.442695
    %v100 = vpow.pop %v99
    %v101 = vsub.f32 %v100, 1.0
    %v102 = vsel %vm97, %v92, %v101
    %v103 = vpack.c.bf16 %v102, %v102
    %v104 = vld [vmem:[%s3] sm:$0xf]
    %v105 = vld [vmem:[%s3 + $0x4] sm:$0xf]
    %v106 = vld [vmem:[%s3 + $0x8] sm:$0xf]
    %v107 = vld [vmem:[%s3 + $0xc] sm:$0xf]
    %v108 = vld [vmem:[%s3 + $0x10] sm:$0xf]
    %v109 = vld [vmem:[%s3 + $0x14] sm:$0xf]
    %v110 = vld [vmem:[%s3 + $0x18] sm:$0xf]
    %v111 = vld [vmem:[%s3 + $0x1c] sm:$0xf]
    %v112 = vld [vmem:[%s4] sm:$0x1]
    %v114 = vlaneseq
    %v115 = vshrl.u32 %v114, 7
    %v116 = vsub.s32 0, %v115
    %v117 = vrot.slane %v112, %v116
    %v127 = vunpack.c.l.b16 %v104
    %v128 = vunpack.c.l.b16 %v105
    %v129 = vunpack.c.l.b16 %v106
    %v130 = vunpack.c.l.b16 %v107
    %v131 = vunpack.c.l.b16 %v108
    %v132 = vunpack.c.l.b16 %v109
    %v133 = vunpack.c.l.b16 %v110
    %v134 = vunpack.c.l.b16 %v111
    %v135 = vpack.c.b16 %v128, %v127
    %v136 = vpack.c.b16 %v130, %v129
    %v137 = vpack.c.b16 %v132, %v131
    %v138 = vpack.c.b16 %v134, %v133
    %vm143 = vcmask 523264
    %v145 = vsel %vm143, %v103, 0
    %147 = vmatprep.subr.bf16.mxu0 0
    %148 = vmatpush1.bf16.msra.mxu0 %v135
    %149 = vmatprep.subr.bf16.mxu0 0
    %150 = vmatpush1.bf16.msra.mxu0 %v136
    %151 = vmatprep.subr.bf16.mxu0 0
    %152 = vmatpush1.bf16.msra.mxu0 %v137
    %153 = vmatprep.subr.bf16.mxu0 0
    %154 = vmatpush1.bf16.msra.mxu0 %v138
    %155 = vmatprep.subr.bf16.mxu0 0
    %156 = vmatpush1.bf16.msra.mxu0 0
    %157 = vmatprep.subr.bf16.mxu0 0
    %158 = vmatpush1.bf16.msra.mxu0 0
    %159 = vmatprep.subr.bf16.mxu0 0
    %160 = vmatpush1.bf16.msra.mxu0 0
    %161 = vmatprep.subr.bf16.mxu0 0
    %162 = vmatpush1.bf16.msra.mxu0 0
    %163 = vmatprep.subr.bf16.mxu0 0
    %164 = vmatpush1.bf16.msra.mxu0 0
    %165 = vmatprep.subr.bf16.mxu0 0
    %166 = vmatpush1.bf16.msra.mxu0 0
    %167 = vmatprep.subr.bf16.mxu0 0
    %168 = vmatpush1.bf16.msra.mxu0 0
    %169 = vmatprep.subr.bf16.mxu0 0
    %170 = vmatpush1.bf16.msra.mxu0 0
    %171 = vmatprep.subr.bf16.mxu0 0
    %172 = vmatpush1.bf16.msra.mxu0 0
    %173 = vmatprep.subr.bf16.mxu0 0
    %174 = vmatpush1.bf16.msra.mxu0 0
    %175 = vmatprep.subr.bf16.mxu0 0
    %176 = vmatpush1.bf16.msra.mxu0 0
    %177 = vmatprep.subr.bf16.mxu0 0
    %178 = vmatpush1.bf16.msra.mxu0 0
    %179 = vmatprep.mubr.bf16.mxu0 0
    %180 = vmatmul.mubr.bf16.gmra.mrb[0].mxu0 %v145
    %v181 = vpop.f32.mrb[0].mxu0
    %v182 = vadd.f32 %v117, %v181
    %v183 = vpop.f32.mrb[0].mxu0
    %v184 = vpop.f32.mrb[0].mxu0
    %v185 = vpop.f32.mrb[0].mxu0
    %186 = vdwg.mxu0
    %vm187 = vcmp.gt.f32.partialorder %v182, 0.0
    %v188 = vmin.f32 %v182, 0.0
    %v189 = vmul.f32 %v188, 1.442695
    %v190 = vpow.pop %v189
    %v191 = vsub.f32 %v190, 1.0
    %v192 = vsel %vm187, %v182, %v191
    %v193 = vpack.c.bf16 %v192, %v192
    %v194 = vld [vmem:[%s5] sm:$0xf]
    %v195 = vld [vmem:[%s5 + $0x4] sm:$0xf]
    %v196 = vld [vmem:[%s5 + $0x8] sm:$0xf]
    %v197 = vld [vmem:[%s5 + $0xc] sm:$0xf]
    %v198 = vld [vmem:[%s6] sm:$0x1]
    %v200 = vlaneseq
    %v201 = vshrl.u32 %v200, 7
    %v202 = vsub.s32 0, %v201
    %v203 = vrot.slane %v198, %v202
    %v209 = vunpack.c.l.b16 %v194
    %v210 = vunpack.c.l.b16 %v195
    %v211 = vunpack.c.l.b16 %v196
    %v212 = vunpack.c.l.b16 %v197
    %v213 = vpack.c.b16 %v210, %v209
    %v214 = vpack.c.b16 %v212, %v211
    %v218 = vsel %vm53, %v193, 0
    %220 = vmatprep.subr.bf16.mxu0 0
    %221 = vmatpush1.bf16.msra.mxu0 %v213
    %222 = vmatprep.subr.bf16.mxu0 0
    %223 = vmatpush1.bf16.msra.mxu0 %v214
    %224 = vmatprep.subr.bf16.mxu0 0
    %225 = vmatpush1.bf16.msra.mxu0 0
    %226 = vmatprep.subr.bf16.mxu0 0
    %227 = vmatpush1.bf16.msra.mxu0 0
    %228 = vmatprep.subr.bf16.mxu0 0
    %229 = vmatpush1.bf16.msra.mxu0 0
    %230 = vmatprep.subr.bf16.mxu0 0
    %231 = vmatpush1.bf16.msra.mxu0 0
    %232 = vmatprep.subr.bf16.mxu0 0
    %233 = vmatpush1.bf16.msra.mxu0 0
    %234 = vmatprep.subr.bf16.mxu0 0
    %235 = vmatpush1.bf16.msra.mxu0 0
    %236 = vmatprep.subr.bf16.mxu0 0
    %237 = vmatpush1.bf16.msra.mxu0 0
    %238 = vmatprep.subr.bf16.mxu0 0
    %239 = vmatpush1.bf16.msra.mxu0 0
    %240 = vmatprep.subr.bf16.mxu0 0
    %241 = vmatpush1.bf16.msra.mxu0 0
    %242 = vmatprep.subr.bf16.mxu0 0
    %243 = vmatpush1.bf16.msra.mxu0 0
    %244 = vmatprep.subr.bf16.mxu0 0
    %245 = vmatpush1.bf16.msra.mxu0 0
    %246 = vmatprep.subr.bf16.mxu0 0
    %247 = vmatpush1.bf16.msra.mxu0 0
    %248 = vmatprep.subr.bf16.mxu0 0
    %249 = vmatpush1.bf16.msra.mxu0 0
    %250 = vmatprep.subr.bf16.mxu0 0
    %251 = vmatpush1.bf16.msra.mxu0 0
    %252 = vmatprep.mubr.bf16.mxu0 0
    %253 = vmatmul.mubr.bf16.gmra.mrb[0].mxu0 %v218
    %v254 = vpop.f32.mrb[0].mxu0
    %v255 = vadd.f32 %v203, %v254
    %v256 = vpop.f32.mrb[0].mxu0
    %v257 = vpop.f32.mrb[0].mxu0
    %v258 = vpop.f32.mrb[0].mxu0
    %259 = vdwg.mxu0
    %260 = vmax.xlane.f32.xlu0 %v255
    %v261 = vpop.xlane.xlu0 %260
    %v262 = vsub.f32 %v255, %v261
    %v263 = vmul.f32 %v262, 1.442695
    %v264 = vpow.pop %v263
    %265 = vadd.xlane.f32.xlu0 %v264
    %v266 = vpop.xlane.xlu0 %265
    %v267 = vrcp.pop %v266
    %v268 = vmul.f32 %v264, %v267
    %269 = vst [vmem:[#allocation2] sm:$0xff] %v268
    // Predicated region
    $region30: #{tpu_custom_call.1} parent=1 // pred_check
      _
    $region31: #{tpu_custom_call.1} parent=1 // pred_check_branch
      %271 = sbr.rel (0) target = $region33
    $region32: #{tpu_custom_call.1} parent=1 // pred_region
      %s273 = ssub.s32 128, 128
      %274 = vsyncadd [#allocation3], %s273
      %s276 = sshll.u32 [#allocation2], 4
      %s277 = int_to_ptr.vmem [resolvable:$true] %s276
      %279 = dma.vmem_to_hbm [thread:$0]  %s277, 128, %s7, [#allocation3]
    $region33: #{tpu_custom_call.1} parent=1 // pred_fallthru
      _
    // Predicated region
    $region34: #{tpu_custom_call.1} parent=1 // pred_check
      _
    $region35: #{tpu_custom_call.1} parent=1 // pred_check_branch
      %281 = sbr.rel (0) target = $region37
    $region36: #{tpu_custom_call.1} parent=1 // pred_region
      %282 = dma.done [#allocation3], 128
    $region37: #{tpu_custom_call.1} parent=1 // pred_fallthru
      _
    %283 = vsyncpa [#allocation3], 1

</llo_original>
